<compile_context>
chip_gen: v6e
topology: v6e:2x2x1
jax: 0.10.0
libtpu: 0.0.40
codegen_flags: <defaults>
</compile_context>

<pallas_src>
import numpy as np
import jax
import jax.numpy as jnp
from jax.experimental import pallas as pl
from jax.experimental.pallas import tpu as pltpu

EPS = 1e-7


def _round_up(v, m):
    return ((v + m - 1) // m) * m


def _make_group_projection_kernel(num_iter, stiffness, Gp):
    """Kernel over one (TB, Rp) tile: TB batch rows (sublanes), Rp = padded N*D lanes."""

    def kernel(x_ref, wr_ref, ws_ref, bias_ref, o_ref):
        x = x_ref[...].astype(jnp.float32)      # (TB, Rp)
        Wr = wr_ref[...]                         # (Rp, 2*Gp): [M*w ; 4*M*wg^2]^T
        Ws = ws_ref[...]                         # (Gp, Rp):  M*wg (scatter)
        bias = bias_ref[...]                     # (1, Gp)

        # num_iter is small & static -> unrolled Python loop.
        for ite in range(num_iter):
            x2 = x * x                                                    # full-tile mul #1
            # One MXU stream: per-group constraint and denominator together.
            red = jnp.dot(x2, Wr, preferred_element_type=jnp.float32)    # (TB, 2*Gp)
            cons = red[:, :Gp] + bias                                     # C_g per batch row
            den = red[:, Gp:] + EPS                                       # sum(grad^2) + eps
            k_iter = 1.0
            if stiffness < 1.0:
                k_iter = 1.0 - (1.0 - stiffness) ** (1.0 / (ite + 1))
            # delta = -k*s*grad = (-2k*C/den) * (wg*x); scalars folded into coeff.
            coeff = (-2.0 * k_iter) * cons * pl.reciprocal(den, approx=False)  # (TB, Gp)
            s_rows = jnp.dot(coeff, Ws, preferred_element_type=jnp.float32)    # (TB, Rp)
            x = x + s_rows * x                                            # full-tile mul #2

        o_ref[...] = x.astype(o_ref.dtype)

    return kernel


def _choose_batch_tile(B, Rp, batch_tile):
    Bp8 = _round_up(B, 8)
    if batch_tile is not None:
        TB = max(8, _round_up(int(batch_tile), 8))
    else:
        # Resident VMEM per batch row: x-in + out double-buffered (4 copies) plus
        # ~3 live (TB, Rp) intermediates inside the body -> ~7 * Rp * 4 bytes.
        budget = 24 * 1024 * 1024
        per_row = 7 * Rp * 4
        TB = max(8, min(512, (budget // max(per_row, 1)) // 8 * 8))
    if Bp8 <= TB:
        return Bp8                       # whole (small) batch in one grid step
    # >= 2 grid steps: rebalance so padding waste is minimal.
    num_tiles = -(-Bp8 // TB)
    return _round_up(-(-Bp8 // num_tiles), 8)


def group_projection_forward(x, w, groups, group_bias, *, num_iter=3,
                             stiffness=1.0, boundary_mask=None, batch_tile=None):
    """x: (B, N, D); w: (N, D); groups: list of disjoint particle-index arrays."""
    B, N, D = x.shape
    R = N * D
    G = len(groups)
    Rp = _round_up(R, 128)    # rows (particle*dim) on the lane axis
    Gp = _round_up(G, 8)      # padded groups (zero-membership groups are inert)

    # Per-row weights and (optional) boundary mask, padded with zeros.
    w_flat = np.zeros((Rp,), dtype=np.float32)
    w_flat[:R] = np.asarray(w, dtype=np.float32).reshape(-1)
    mask_flat = np.zeros((Rp,), dtype=np.float32)
    if boundary_mask is not None:
        bm = np.asarray(boundary_mask, dtype=np.float32).reshape(N)
        mask_flat[:R] = np.repeat(bm, D)
    else:
        mask_flat[:R] = 1.0
    wg = w_flat * mask_flat                      # gradient weight (boundary rows zeroed)

    # One-hot row -> group membership (row = particle*D + dim).
    Mhot = np.zeros((Gp, Rp), dtype=np.float32)
    for g, idx in enumerate(groups):
        for n in np.asarray(idx).reshape(-1):
            n = int(n)
            Mhot[g, n * D:(n + 1) * D] = 1.0

    # Fold weights into the one-hot matrices (host side, once).
    Wr_np = np.concatenate(
        [(Mhot * w_flat[None, :]).T,             # cons columns: sum(w * x^2)
         (4.0 * Mhot * (wg * wg)[None, :]).T],   # den  columns: sum(grad^2)
        axis=1)                                   # (Rp, 2*Gp)
    Ws_np = Mhot * wg[None, :]                    # (Gp, Rp) scatter (coeff -> rows), incl. wg
    bias_np = np.zeros((1, Gp), dtype=np.float32)
    bias_np[0, :G] = np.asarray(group_bias, dtype=np.float32).reshape(-1)

    Wr = jnp.asarray(Wr_np)
    Ws = jnp.asarray(Ws_np)
    bias = jnp.asarray(bias_np)

    # Batch-major layout: free reshape, no transposes.
    x2d = jnp.asarray(x).reshape(B, R)

    TB = _choose_batch_tile(B, Rp, batch_tile)
    num_tiles = pl.cdiv(_round_up(B, 8), TB)
    Bp = num_tiles * TB
    # Zero padding is self-consistent: padded batch rows / lane columns get zero
    # updates (grad contribution is zero there) and are sliced off afterwards.
    x2d = jnp.pad(x2d, ((0, Bp - B), (0, Rp - R)))

    kernel = _make_group_projection_kernel(num_iter, float(stiffness), Gp)

    out2d = pl.pallas_call(
        kernel,
        out_shape=jax.ShapeDtypeStruct((Bp, Rp), x.dtype),
        grid_spec=pltpu.PrefetchScalarGridSpec(
            num_scalar_prefetch=0,
            grid=(num_tiles,),
            in_specs=[
                pl.BlockSpec((TB, Rp), lambda b: (b, 0)),        # x tile
                pl.BlockSpec((Rp, 2 * Gp), lambda b: (0, 0)),    # reduce matrix (constant)
                pl.BlockSpec((Gp, Rp), lambda b: (0, 0)),        # scatter matrix (constant)
                pl.BlockSpec((1, Gp), lambda b: (0, 0)),         # per-group bias (constant)
            ],
            out_specs=pl.BlockSpec((TB, Rp), lambda b: (b, 0)),
        ),
        compiler_params=pltpu.CompilerParams(
            dimension_semantics=("parallel",),
            vmem_limit_bytes=48 * 1024 * 1024,
        ),
    )(x2d, Wr, Ws, bias)

    return out2d[:B, :R].reshape(B, N, D)


def group_projection_reference(x, w, groups, group_bias, *, num_iter=3,
                               stiffness=1.0, boundary_mask=None):
    """Pure-JAX reference mirroring the PyTorch GroupProjection2 forward."""
    upd = x.astype(jnp.float32)
    w = jnp.asarray(w, dtype=jnp.float32)
    bm = None
    if boundary_mask is not None:
        bm = jnp.asarray(boundary_mask, dtype=jnp.float32).reshape(-1)
    for ite in range(num_iter):
        for g, idx in enumerate(groups):
            idx = jnp.asarray(idx)
            gx = upd[:, idx, :]                                        # (B, |g|, D)
            gw = w[idx, :]                                             # (|g|, D)
            cons = jnp.sum(gw * gx * gx, axis=(1, 2)) + group_bias[g]  # (B,)
            grad = 2.0 * gw * gx
            if bm is not None:
                grad = grad * bm[idx][None, :, None]
            denom = jnp.sum(grad * grad, axis=(1, 2)) + EPS            # (B,)
            s = cons / denom
            delta = -s[:, None, None] * grad
            if stiffness < 1.0:
                delta = delta * (1.0 - (1.0 - stiffness) ** (1.0 / (ite + 1)))
            upd = upd.at[:, idx, :].set(gx + delta)
    return upd.astype(x.dtype)


if __name__ == "__main__":
    # batch=2, num_particles=16, dimension=3 (typical PBD setup).
    B, N, D = 2, 16, 3
    num_iter = 3
    key = jax.random.PRNGKey(0)
    kx, kw = jax.random.split(key)
    x = jax.random.normal(kx, (B, N, D), dtype=jnp.float32)
    w = jax.random.uniform(kw, (N, D), dtype=jnp.float32, minval=0.5, maxval=1.5)

    # Two disjoint particle groups, each with its own quadratic constraint
    # (concrete instantiation of the `projs` / `groups` arguments).
    groups = [jnp.arange(0, 8, dtype=jnp.int32), jnp.arange(8, 16, dtype=jnp.int32)]
    group_bias = [-1.0, -0.5]

    out = group_projection_forward(x, w, groups, group_bias, num_iter=num_iter)
    out = jax.block_until_ready(out)
    ref = group_projection_reference(x, w, groups, group_bias, num_iter=num_iter)
    assert out.shape == (B, N, D)
    err = float(jnp.max(jnp.abs(out - ref)))
    # 1e-4: allows for MXU multi-pass f32 reductions / different summation order.
    assert jnp.allclose(out, ref, atol=1e-4, rtol=1e-4), f"max err = {err}"

    # Second configuration: boundary mask + soft stiffness.
    mask = jnp.ones((N,), dtype=jnp.float32).at[0].set(0.0).at[N - 1].set(0.0)
    out2 = jax.block_until_ready(
        group_projection_forward(x, w, groups, group_bias, num_iter=num_iter,
                                 stiffness=0.8, boundary_mask=mask))
    ref2 = group_projection_reference(x, w, groups, group_bias, num_iter=num_iter,
                                      stiffness=0.8, boundary_mask=mask)
    err2 = float(jnp.max(jnp.abs(out2 - ref2)))
    assert jnp.allclose(out2, ref2, atol=1e-4, rtol=1e-4), f"max err = {err2}"

    print("KERNEL_OK")
</pallas_src>

<mosaic_0001>
module attributes {stable_mosaic.version = 11 : i64} {
  func.func @kernel(%arg0: i32, %arg1: memref<8x128xf32, #tpu.memory_space<vmem>>, %arg2: memref<128x16xf32, #tpu.memory_space<vmem>>, %arg3: memref<8x128xf32, #tpu.memory_space<vmem>>, %arg4: memref<1x8xf32, #tpu.memory_space<vmem>>, %arg5: memref<8x128xf32, #tpu.memory_space<vmem>>) attributes {dimension_semantics = [#tpu.dimension_semantics<parallel>], iteration_bounds = array<i64: 1>, scalar_prefetch = 0 : i64, scratch_operands = 0 : i64, tpu.core_type = #tpu.core_type<tc>, window_params = [{transform_indices = @transform_0, window_bounds = array<i64: 8, 128>}, {pipeline_mode = #tpu.pipeline_mode<synchronous>, transform_indices = @transform_1, window_bounds = array<i64: 128, 16>}, {pipeline_mode = #tpu.pipeline_mode<synchronous>, transform_indices = @transform_2, window_bounds = array<i64: 8, 128>}, {pipeline_mode = #tpu.pipeline_mode<synchronous>, transform_indices = @transform_3, window_bounds = array<i64: 1, 8>}, {transform_indices = @transform_4, window_bounds = array<i64: 8, 128>}]} {
    %c0 = arith.constant 0 : index
    %c0_0 = arith.constant 0 : index
    %0 = vector.load %arg1[%c0, %c0_0] : memref<8x128xf32, #tpu.memory_space<vmem>>, vector<8x128xf32>
    %c0_1 = arith.constant 0 : index
    %c0_2 = arith.constant 0 : index
    %1 = vector.load %arg2[%c0_1, %c0_2] : memref<128x16xf32, #tpu.memory_space<vmem>>, vector<128x16xf32>
    %c0_3 = arith.constant 0 : index
    %c0_4 = arith.constant 0 : index
    %2 = vector.load %arg3[%c0_3, %c0_4] : memref<8x128xf32, #tpu.memory_space<vmem>>, vector<8x128xf32>
    %c0_5 = arith.constant 0 : index
    %c0_6 = arith.constant 0 : index
    %3 = vector.load %arg4[%c0_5, %c0_6] : memref<1x8xf32, #tpu.memory_space<vmem>>, vector<1x8xf32>
    %4 = arith.mulf %0, %0 : vector<8x128xf32>
    %cst = arith.constant dense<0.000000e+00> : vector<8x16xf32>
    %5 = tpu.matmul %4, %1, %cst {dimension_numbers = #tpu.dot_dimension_numbers<[1], [0], [0], [1], [0, 0, 1, 1], [], []>} : vector<8x128xf32>, vector<128x16xf32>, vector<8x16xf32> -> vector<8x16xf32>
    %6 = vector.extract_strided_slice %5 {offsets = [0, 0], sizes = [8, 8], strides = [1, 1]} : vector<8x16xf32> to vector<8x8xf32>
    %7 = vector.broadcast %3 : vector<1x8xf32> to vector<8x8xf32>
    %8 = arith.addf %6, %7 : vector<8x8xf32>
    %9 = vector.extract_strided_slice %5 {offsets = [0, 8], sizes = [8, 8], strides = [1, 1]} : vector<8x16xf32> to vector<8x8xf32>
    %cst_7 = arith.constant 1.000000e-07 : f32
    %10 = vector.broadcast %cst_7 : f32 to vector<8x8xf32>
    %11 = arith.addf %9, %10 : vector<8x8xf32>
    %cst_8 = arith.constant -2.000000e+00 : f32
    %12 = vector.broadcast %cst_8 : f32 to vector<8x8xf32>
    %13 = arith.mulf %12, %8 : vector<8x8xf32>
    %14 = tpu.reciprocal %11 : vector<8x8xf32> -> vector<8x8xf32>
    %15 = arith.mulf %13, %14 : vector<8x8xf32>
    %cst_9 = arith.constant dense<0.000000e+00> : vector<8x128xf32>
    %16 = tpu.matmul %15, %2, %cst_9 {dimension_numbers = #tpu.dot_dimension_numbers<[1], [0], [0], [1], [0, 0, 1, 1], [], []>} : vector<8x8xf32>, vector<8x128xf32>, vector<8x128xf32> -> vector<8x128xf32>
    %17 = arith.mulf %16, %0 : vector<8x128xf32>
    %18 = arith.addf %0, %17 : vector<8x128xf32>
    %19 = arith.mulf %18, %18 : vector<8x128xf32>
    %cst_10 = arith.constant dense<0.000000e+00> : vector<8x16xf32>
    %20 = tpu.matmul %19, %1, %cst_10 {dimension_numbers = #tpu.dot_dimension_numbers<[1], [0], [0], [1], [0, 0, 1, 1], [], []>} : vector<8x128xf32>, vector<128x16xf32>, vector<8x16xf32> -> vector<8x16xf32>
    %21 = vector.extract_strided_slice %20 {offsets = [0, 0], sizes = [8, 8], strides = [1, 1]} : vector<8x16xf32> to vector<8x8xf32>
    %22 = vector.broadcast %3 : vector<1x8xf32> to vector<8x8xf32>
    %23 = arith.addf %21, %22 : vector<8x8xf32>
    %24 = vector.extract_strided_slice %20 {offsets = [0, 8], sizes = [8, 8], strides = [1, 1]} : vector<8x16xf32> to vector<8x8xf32>
    %cst_11 = arith.constant 1.000000e-07 : f32
    %25 = vector.broadcast %cst_11 : f32 to vector<8x8xf32>
    %26 = arith.addf %24, %25 : vector<8x8xf32>
    %cst_12 = arith.constant -2.000000e+00 : f32
    %27 = vector.broadcast %cst_12 : f32 to vector<8x8xf32>
    %28 = arith.mulf %27, %23 : vector<8x8xf32>
    %29 = tpu.reciprocal %26 : vector<8x8xf32> -> vector<8x8xf32>
    %30 = arith.mulf %28, %29 : vector<8x8xf32>
    %cst_13 = arith.constant dense<0.000000e+00> : vector<8x128xf32>
    %31 = tpu.matmul %30, %2, %cst_13 {dimension_numbers = #tpu.dot_dimension_numbers<[1], [0], [0], [1], [0, 0, 1, 1], [], []>} : vector<8x8xf32>, vector<8x128xf32>, vector<8x128xf32> -> vector<8x128xf32>
    %32 = arith.mulf %31, %18 : vector<8x128xf32>
    %33 = arith.addf %18, %32 : vector<8x128xf32>
    %34 = arith.mulf %33, %33 : vector<8x128xf32>
    %cst_14 = arith.constant dense<0.000000e+00> : vector<8x16xf32>
    %35 = tpu.matmul %34, %1, %cst_14 {dimension_numbers = #tpu.dot_dimension_numbers<[1], [0], [0], [1], [0, 0, 1, 1], [], []>} : vector<8x128xf32>, vector<128x16xf32>, vector<8x16xf32> -> vector<8x16xf32>
    %36 = vector.extract_strided_slice %35 {offsets = [0, 0], sizes = [8, 8], strides = [1, 1]} : vector<8x16xf32> to vector<8x8xf32>
    %37 = vector.broadcast %3 : vector<1x8xf32> to vector<8x8xf32>
    %38 = arith.addf %36, %37 : vector<8x8xf32>
    %39 = vector.extract_strided_slice %35 {offsets = [0, 8], sizes = [8, 8], strides = [1, 1]} : vector<8x16xf32> to vector<8x8xf32>
    %cst_15 = arith.constant 1.000000e-07 : f32
    %40 = vector.broadcast %cst_15 : f32 to vector<8x8xf32>
    %41 = arith.addf %39, %40 : vector<8x8xf32>
    %cst_16 = arith.constant -2.000000e+00 : f32
    %42 = vector.broadcast %cst_16 : f32 to vector<8x8xf32>
    %43 = arith.mulf %42, %38 : vector<8x8xf32>
    %44 = tpu.reciprocal %41 : vector<8x8xf32> -> vector<8x8xf32>
    %45 = arith.mulf %43, %44 : vector<8x8xf32>
    %cst_17 = arith.constant dense<0.000000e+00> : vector<8x128xf32>
    %46 = tpu.matmul %45, %2, %cst_17 {dimension_numbers = #tpu.dot_dimension_numbers<[1], [0], [0], [1], [0, 0, 1, 1], [], []>} : vector<8x8xf32>, vector<8x128xf32>, vector<8x128xf32> -> vector<8x128xf32>
    %47 = arith.mulf %46, %33 : vector<8x128xf32>
    %48 = arith.addf %33, %47 : vector<8x128xf32>
    %c0_18 = arith.constant 0 : index
    %c0_19 = arith.constant 0 : index
    %49 = vector.load %arg5[%c0_18, %c0_19] : memref<8x128xf32, #tpu.memory_space<vmem>>, vector<8x128xf32>
    tpu.vector_store %arg5[%c0_18, %c0_19], %48 {strides = array<i32>} : memref<8x128xf32, #tpu.memory_space<vmem>>, vector<8x128xf32>,
    return
  }
  func.func @transform_0(%arg0: i32) -> (i32, i32) {
    %c0_i32 = arith.constant 0 : i32
    %c0_i32_0 = arith.constant 0 : i32
    return %arg0, %c0_i32 : i32, i32
  }
  func.func @transform_1(%arg0: i32) -> (i32, i32) {
    %c0_i32 = arith.constant 0 : i32
    %c0_i32_0 = arith.constant 0 : i32
    %c0_i32_1 = arith.constant 0 : i32
    return %c0_i32, %c0_i32_0 : i32, i32
  }
  func.func @transform_2(%arg0: i32) -> (i32, i32) {
    %c0_i32 = arith.constant 0 : i32
    %c0_i32_0 = arith.constant 0 : i32
    %c0_i32_1 = arith.constant 0 : i32
    return %c0_i32, %c0_i32_0 : i32, i32
  }
  func.func @transform_3(%arg0: i32) -> (i32, i32) {
    %c0_i32 = arith.constant 0 : i32
    %c0_i32_0 = arith.constant 0 : i32
    %c0_i32_1 = arith.constant 0 : i32
    return %c0_i32, %c0_i32_0 : i32, i32
  }
  func.func @transform_4(%arg0: i32) -> (i32, i32) {
    %c0_i32 = arith.constant 0 : i32
    %c0_i32_0 = arith.constant 0 : i32
    return %arg0, %c0_i32 : i32, i32
  }
}

</mosaic_0001>

<llo_original>
// kernel: tpu_custom_call.1
$region0: #{tpu_custom_call.1}
  #allocation0 [shape = 'u32[]', space=smem, size = 0x4, offset = 0x4, fixed_abs, tag = 'smem constant byte address 0x4 - core index']
  #allocation1 [shape = 'u32[144,128]{1,0:T(1,128)}', space=vmem, size = 0x12000, scoped, tag = 'internal scratch']
  %s0 = inlined_call_operand.vmem [shape: f32[8,128], index: 0, kind: input, shape index: {}]
  %s1 = inlined_call_operand.vmem [shape: f32[128,16], index: 1, kind: input, shape index: {}]
  %s2 = inlined_call_operand.vmem [shape: f32[8,128], index: 2, kind: input, shape index: {}]
  %s3 = inlined_call_operand.vmem [shape: f32[1,8], index: 3, kind: input, shape index: {}]
  %s4 = inlined_call_operand.hbm [shape: f32[8,128], index: 4, kind: output, shape index: {}]
  %s5 = sld [smem:[#allocation0]]
  $region26: #{tpu_custom_call.1} parent=0
    _
  %s7 = ssub.s32 1, %s5
  %s8 = scalar_select 0, %s7, %s5
  $region1: #{tpu_custom_call.1} parent=0
    #allocation2 [shape = 'u8[4096]{0}', space=vmem, size = 0x1000, scoped, tag = 'output window, operand 0, single buffered']
    #allocation3 [shape = 's32[1]{0}', space=sflag, size = 0x4, scoped, tag = 'scoped memory for tpu_custom_call.1']
    %9 = vsyncpa [#allocation3], 0
    // Predicated region
    $region2: #{tpu_custom_call.1} parent=1 // pred_check
      _
    $region3: #{tpu_custom_call.1} parent=1 // pred_check_branch
      %11 = sbr.rel (0) target = $region5
    $region4: #{tpu_custom_call.1} parent=1 // pred_region
      _
    $region5: #{tpu_custom_call.1} parent=1 // pred_fallthru
      _
    // Predicated region
    $region6: #{tpu_custom_call.1} parent=1 // pred_check
      _
    $region7: #{tpu_custom_call.1} parent=1 // pred_check_branch
      %13 = sbr.rel (0) target = $region9
    $region8: #{tpu_custom_call.1} parent=1 // pred_region
      _
    $region9: #{tpu_custom_call.1} parent=1 // pred_fallthru
      _
    // Predicated region
    $region10: #{tpu_custom_call.1} parent=1 // pred_check
      _
    $region11: #{tpu_custom_call.1} parent=1 // pred_check_branch
      %15 = sbr.rel (0) target = $region13
    $region12: #{tpu_custom_call.1} parent=1 // pred_region
      _
    $region13: #{tpu_custom_call.1} parent=1 // pred_fallthru
      _
    // Predicated region
    $region14: #{tpu_custom_call.1} parent=1 // pred_check
      _
    $region15: #{tpu_custom_call.1} parent=1 // pred_check_branch
      %17 = sbr.rel (0) target = $region17
    $region16: #{tpu_custom_call.1} parent=1 // pred_region
      _
    $region17: #{tpu_custom_call.1} parent=1 // pred_fallthru
      _
    %v18 = vld [vmem:[%s0] sm:$0xff]
    %v19 = vld [vmem:[%s1] sm:$0xff]
    %v20 = vld [vmem:[%s1 + $0x8] sm:$0xff]
    %v21 = vld [vmem:[%s1 + $0x10] sm:$0xff]
    %v22 = vld [vmem:[%s1 + $0x18] sm:$0xff]
    %v23 = vld [vmem:[%s1 + $0x20] sm:$0xff]
    %v24 = vld [vmem:[%s1 + $0x28] sm:$0xff]
    %v25 = vld [vmem:[%s1 + $0x30] sm:$0xff]
    %v26 = vld [vmem:[%s1 + $0x38] sm:$0xff]
    %v27 = vld [vmem:[%s1 + $0x40] sm:$0xff]
    %v28 = vld [vmem:[%s1 + $0x48] sm:$0xff]
    %v29 = vld [vmem:[%s1 + $0x50] sm:$0xff]
    %v30 = vld [vmem:[%s1 + $0x58] sm:$0xff]
    %v31 = vld [vmem:[%s1 + $0x60] sm:$0xff]
    %v32 = vld [vmem:[%s1 + $0x68] sm:$0xff]
    %v33 = vld [vmem:[%s1 + $0x70] sm:$0xff]
    %v34 = vld [vmem:[%s1 + $0x78] sm:$0xff]
    %v35 = vld [vmem:[%s2] sm:$0xff]
    %v36 = vld [vmem:[%s3] sm:$0x1]
    %v37 = vmul.f32 %v18, %v18
    %38 = vmatprep.subr.mxu0 0.0
    %39 = vmatpush1.msra.mxu0 %v34
    %40 = vmatprep.subr.mxu0 0.0
    %41 = vmatpush1.msra.mxu0 %v33
    %42 = vmatprep.subr.mxu0 0.0
    %43 = vmatpush1.msra.mxu0 %v32
    %44 = vmatprep.subr.mxu0 0.0
    %45 = vmatpush1.msra.mxu0 %v31
    %46 = vmatprep.subr.mxu0 0.0
    %47 = vmatpush1.msra.mxu0 %v30
    %48 = vmatprep.subr.mxu0 0.0
    %49 = vmatpush1.msra.mxu0 %v29
    %50 = vmatprep.subr.mxu0 0.0
    %51 = vmatpush1.msra.mxu0 %v28
    %52 = vmatprep.subr.mxu0 0.0
    %53 = vmatpush1.msra.mxu0 %v27
    %54 = vmatprep.subr.mxu0 0.0
    %55 = vmatpush1.msra.mxu0 %v26
    %56 = vmatprep.subr.mxu0 0.0
    %57 = vmatpush1.msra.mxu0 %v25
    %58 = vmatprep.subr.mxu0 0.0
    %59 = vmatpush1.msra.mxu0 %v24
    %60 = vmatprep.subr.mxu0 0.0
    %61 = vmatpush1.msra.mxu0 %v23
    %62 = vmatprep.subr.mxu0 0.0
    %63 = vmatpush1.msra.mxu0 %v22
    %64 = vmatprep.subr.mxu0 0.0
    %65 = vmatpush1.msra.mxu0 %v21
    %66 = vmatprep.subr.mxu0 0.0
    %67 = vmatpush1.msra.mxu0 %v20
    %68 = vmatprep.subr.mxu0 0.0
    %69 = vmatpush1.msra.mxu0 %v19
    %70 = vmatprep.subr.mxu0 0.0
    %71 = vmatpush2.msra.mxu0 0.0
    %72 = vmatprep.subr.mxu0 0.0
    %73 = vmatpush2.msra.mxu0 0.0
    %74 = vmatprep.subr.mxu0 0.0
    %75 = vmatpush2.msra.mxu0 0.0
    %76 = vmatprep.subr.mxu0 0.0
    %77 = vmatpush2.msra.mxu0 0.0
    %78 = vmatprep.subr.mxu0 0.0
    %79 = vmatpush2.msra.mxu0 0.0
    %80 = vmatprep.subr.mxu0 0.0
    %81 = vmatpush2.msra.mxu0 0.0
    %82 = vmatprep.subr.mxu0 0.0
    %83 = vmatpush2.msra.mxu0 0.0
    %84 = vmatprep.subr.mxu0 0.0
    %85 = vmatpush2.msra.mxu0 0.0
    %86 = vmatprep.subr.mxu0 0.0
    %87 = vmatpush2.msra.mxu0 0.0
    %88 = vmatprep.subr.mxu0 0.0
    %89 = vmatpush2.msra.mxu0 0.0
    %90 = vmatprep.subr.mxu0 0.0
    %91 = vmatpush2.msra.mxu0 0.0
    %92 = vmatprep.subr.mxu0 0.0
    %93 = vmatpush2.msra.mxu0 0.0
    %94 = vmatprep.subr.mxu0 0.0
    %95 = vmatpush2.msra.mxu0 0.0
    %96 = vmatprep.subr.mxu0 0.0
    %97 = vmatpush2.msra.mxu0 0.0
    %98 = vmatprep.subr.mxu0 0.0
    %99 = vmatpush2.msra.mxu0 0.0
    %100 = vmatprep.subr.mxu0 0.0
    %101 = vmatpush2.msra.mxu0 0.0
    %102 = vmatprep.mubr.f32.mxu0 0.0
    %103 = vmatmul.mubr.f32.gmra.mxu0 %v37
    %v104 = vpop.f32.mrf.mxu0
    %v105 = vadd.f32 0.0, %v104
    %v106 = vpop.f32.mrf.mxu0
    %107 = vdwg.mxu0
    %v109 = vlaneseq
    %v110 = vshrl.u32 %v109, 7
    %v111 = vsub.s32 0, %v110
    %v112 = vrot.slane %v36, %v111
    %v114 = vadd.f32 %v105, %v112
    %v115 = vadd.f32 %v105, 1e-07
    %v116 = vmul.f32 %v114, -2.0
    %v117 = vrcp.pop %v115
    %119 = vrot.lane.b32.xlu0 %v117, 120
    %v120 = vpop.permute.xlu0 %119
    %v122 = vmul.f32 %v116, %v120
    %vm123 = vcmask 64512
    %v125 = vsel %vm123, %v122, 0
    %127 = vmatprep.subr.mxu0 0.0
    %128 = vmatpush1.msra.mxu0 0.0
    %129 = vmatprep.subr.mxu0 0.0
    %130 = vmatpush1.msra.mxu0 0.0
    %131 = vmatprep.subr.mxu0 0.0
    %132 = vmatpush1.msra.mxu0 0.0
    %133 = vmatprep.subr.mxu0 0.0
    %134 = vmatpush1.msra.mxu0 0.0
    %135 = vmatprep.subr.mxu0 0.0
    %136 = vmatpush1.msra.mxu0 0.0
    %137 = vmatprep.subr.mxu0 0.0
    %138 = vmatpush1.msra.mxu0 0.0
    %139 = vmatprep.subr.mxu0 0.0
    %140 = vmatpush1.msra.mxu0 0.0
    %141 = vmatprep.subr.mxu0 0.0
    %142 = vmatpush1.msra.mxu0 0.0
    %143 = vmatprep.subr.mxu0 0.0
    %144 = vmatpush1.msra.mxu0 0.0
    %145 = vmatprep.subr.mxu0 0.0
    %146 = vmatpush1.msra.mxu0 0.0
    %147 = vmatprep.subr.mxu0 0.0
    %148 = vmatpush1.msra.mxu0 0.0
    %149 = vmatprep.subr.mxu0 0.0
    %150 = vmatpush1.msra.mxu0 0.0
    %151 = vmatprep.subr.mxu0 0.0
    %152 = vmatpush1.msra.mxu0 0.0
    %153 = vmatprep.subr.mxu0 0.0
    %154 = vmatpush1.msra.mxu0 0.0
    %155 = vmatprep.subr.mxu0 0.0
    %156 = vmatpush1.msra.mxu0 0.0
    %157 = vmatprep.subr.mxu0 0.0
    %158 = vmatpush1.msra.mxu0 %v35
    %159 = vmatprep.subr.mxu0 0.0
    %160 = vmatpush2.msra.mxu0 0.0
    %161 = vmatprep.subr.mxu0 0.0
    %162 = vmatpush2.msra.mxu0 0.0
    %163 = vmatprep.subr.mxu0 0.0
    %164 = vmatpush2.msra.mxu0 0.0
    %165 = vmatprep.subr.mxu0 0.0
    %166 = vmatpush2.msra.mxu0 0.0
    %167 = vmatprep.subr.mxu0 0.0
    %168 = vmatpush2.msra.mxu0 0.0
    %169 = vmatprep.subr.mxu0 0.0
    %170 = vmatpush2.msra.mxu0 0.0
    %171 = vmatprep.subr.mxu0 0.0
    %172 = vmatpush2.msra.mxu0 0.0
    %173 = vmatprep.subr.mxu0 0.0
    %174 = vmatpush2.msra.mxu0 0.0
    %175 = vmatprep.subr.mxu0 0.0
    %176 = vmatpush2.msra.mxu0 0.0
    %177 = vmatprep.subr.mxu0 0.0
    %178 = vmatpush2.msra.mxu0 0.0
    %179 = vmatprep.subr.mxu0 0.0
    %180 = vmatpush2.msra.mxu0 0.0
    %181 = vmatprep.subr.mxu0 0.0
    %182 = vmatpush2.msra.mxu0 0.0
    %183 = vmatprep.subr.mxu0 0.0
    %184 = vmatpush2.msra.mxu0 0.0
    %185 = vmatprep.subr.mxu0 0.0
    %186 = vmatpush2.msra.mxu0 0.0
    %187 = vmatprep.subr.mxu0 0.0
    %188 = vmatpush2.msra.mxu0 0.0
    %189 = vmatprep.subr.mxu0 0.0
    %190 = vmatpush2.msra.mxu0 0.0
    %191 = vmatprep.mubr.f32.mxu0 0.0
    %192 = vmatmul.mubr.f32.gmra.mxu0 %v125
    %v193 = vpop.f32.mrf.mxu0
    %v194 = vadd.f32 0.0, %v193
    %v195 = vpop.f32.mrf.mxu0
    %196 = vdwg.mxu0
    %v197 = vmul.f32 %v194, %v18
    %v198 = vadd.f32 %v18, %v197
    %v199 = vmul.f32 %v198, %v198
    %200 = vmatprep.subr.mxu0 0.0
    %201 = vmatpush1.msra.mxu0 %v34
    %202 = vmatprep.subr.mxu0 0.0
    %203 = vmatpush1.msra.mxu0 %v33
    %204 = vmatprep.subr.mxu0 0.0
    %205 = vmatpush1.msra.mxu0 %v32
    %206 = vmatprep.subr.mxu0 0.0
    %207 = vmatpush1.msra.mxu0 %v31
    %208 = vmatprep.subr.mxu0 0.0
    %209 = vmatpush1.msra.mxu0 %v30
    %210 = vmatprep.subr.mxu0 0.0
    %211 = vmatpush1.msra.mxu0 %v29
    %212 = vmatprep.subr.mxu0 0.0
    %213 = vmatpush1.msra.mxu0 %v28
    %214 = vmatprep.subr.mxu0 0.0
    %215 = vmatpush1.msra.mxu0 %v27
    %216 = vmatprep.subr.mxu0 0.0
    %217 = vmatpush1.msra.mxu0 %v26
    %218 = vmatprep.subr.mxu0 0.0
    %219 = vmatpush1.msra.mxu0 %v25
    %220 = vmatprep.subr.mxu0 0.0
    %221 = vmatpush1.msra.mxu0 %v24
    %222 = vmatprep.subr.mxu0 0.0
    %223 = vmatpush1.msra.mxu0 %v23
    %224 = vmatprep.subr.mxu0 0.0
    %225 = vmatpush1.msra.mxu0 %v22
    %226 = vmatprep.subr.mxu0 0.0
    %227 = vmatpush1.msra.mxu0 %v21
    %228 = vmatprep.subr.mxu0 0.0
    %229 = vmatpush1.msra.mxu0 %v20
    %230 = vmatprep.subr.mxu0 0.0
    %231 = vmatpush1.msra.mxu0 %v19
    %232 = vmatprep.subr.mxu0 0.0
    %233 = vmatpush2.msra.mxu0 0.0
    %234 = vmatprep.subr.mxu0 0.0
    %235 = vmatpush2.msra.mxu0 0.0
    %236 = vmatprep.subr.mxu0 0.0
    %237 = vmatpush2.msra.mxu0 0.0
    %238 = vmatprep.subr.mxu0 0.0
    %239 = vmatpush2.msra.mxu0 0.0
    %240 = vmatprep.subr.mxu0 0.0
    %241 = vmatpush2.msra.mxu0 0.0
    %242 = vmatprep.subr.mxu0 0.0
    %243 = vmatpush2.msra.mxu0 0.0
    %244 = vmatprep.subr.mxu0 0.0
    %245 = vmatpush2.msra.mxu0 0.0
    %246 = vmatprep.subr.mxu0 0.0
    %247 = vmatpush2.msra.mxu0 0.0
    %248 = vmatprep.subr.mxu0 0.0
    %249 = vmatpush2.msra.mxu0 0.0
    %250 = vmatprep.subr.mxu0 0.0
    %251 = vmatpush2.msra.mxu0 0.0
    %252 = vmatprep.subr.mxu0 0.0
    %253 = vmatpush2.msra.mxu0 0.0
    %254 = vmatprep.subr.mxu0 0.0
    %255 = vmatpush2.msra.mxu0 0.0
    %256 = vmatprep.subr.mxu0 0.0
    %257 = vmatpush2.msra.mxu0 0.0
    %258 = vmatprep.subr.mxu0 0.0
    %259 = vmatpush2.msra.mxu0 0.0
    %260 = vmatprep.subr.mxu0 0.0
    %261 = vmatpush2.msra.mxu0 0.0
    %262 = vmatprep.subr.mxu0 0.0
    %263 = vmatpush2.msra.mxu0 0.0
    %264 = vmatprep.mubr.f32.mxu0 0.0
    %265 = vmatmul.mubr.f32.gmra.mxu0 %v199
    %v266 = vpop.f32.mrf.mxu0
    %v267 = vadd.f32 0.0, %v266
    %v268 = vpop.f32.mrf.mxu0
    %269 = vdwg.mxu0
    %v270 = vadd.f32 %v267, %v112
    %v271 = vadd.f32 %v267, 1e-07
    %v272 = vmul.f32 %v270, -2.0
    %v273 = vrcp.pop %v271
    %275 = vrot.lane.b32.xlu0 %v273, 120
    %v276 = vpop.permute.xlu0 %275
    %v278 = vmul.f32 %v272, %v276
    %v280 = vsel %vm123, %v278, 0
    %282 = vmatprep.subr.mxu0 0.0
    %283 = vmatpush1.msra.mxu0 0.0
    %284 = vmatprep.subr.mxu0 0.0
    %285 = vmatpush1.msra.mxu0 0.0
    %286 = vmatprep.subr.mxu0 0.0
    %287 = vmatpush1.msra.mxu0 0.0
    %288 = vmatprep.subr.mxu0 0.0
    %289 = vmatpush1.msra.mxu0 0.0
    %290 = vmatprep.subr.mxu0 0.0
    %291 = vmatpush1.msra.mxu0 0.0
    %292 = vmatprep.subr.mxu0 0.0
    %293 = vmatpush1.msra.mxu0 0.0
    %294 = vmatprep.subr.mxu0 0.0
    %295 = vmatpush1.msra.mxu0 0.0
    %296 = vmatprep.subr.mxu0 0.0
    %297 = vmatpush1.msra.mxu0 0.0
    %298 = vmatprep.subr.mxu0 0.0
    %299 = vmatpush1.msra.mxu0 0.0
    %300 = vmatprep.subr.mxu0 0.0
    %301 = vmatpush1.msra.mxu0 0.0
    %302 = vmatprep.subr.mxu0 0.0
    %303 = vmatpush1.msra.mxu0 0.0
    %304 = vmatprep.subr.mxu0 0.0
    %305 = vmatpush1.msra.mxu0 0.0
    %306 = vmatprep.subr.mxu0 0.0
    %307 = vmatpush1.msra.mxu0 0.0
    %308 = vmatprep.subr.mxu0 0.0
    %309 = vmatpush1.msra.mxu0 0.0
    %310 = vmatprep.subr.mxu0 0.0
    %311 = vmatpush1.msra.mxu0 0.0
    %312 = vmatprep.subr.mxu0 0.0
    %313 = vmatpush1.msra.mxu0 %v35
    %314 = vmatprep.subr.mxu0 0.0
    %315 = vmatpush2.msra.mxu0 0.0
    %316 = vmatprep.subr.mxu0 0.0
    %317 = vmatpush2.msra.mxu0 0.0
    %318 = vmatprep.subr.mxu0 0.0
    %319 = vmatpush2.msra.mxu0 0.0
    %320 = vmatprep.subr.mxu0 0.0
    %321 = vmatpush2.msra.mxu0 0.0
    %322 = vmatprep.subr.mxu0 0.0
    %323 = vmatpush2.msra.mxu0 0.0
    %324 = vmatprep.subr.mxu0 0.0
    %325 = vmatpush2.msra.mxu0 0.0
    %326 = vmatprep.subr.mxu0 0.0
    %327 = vmatpush2.msra.mxu0 0.0
    %328 = vmatprep.subr.mxu0 0.0
    %329 = vmatpush2.msra.mxu0 0.0
    %330 = vmatprep.subr.mxu0 0.0
    %331 = vmatpush2.msra.mxu0 0.0
    %332 = vmatprep.subr.mxu0 0.0
    %333 = vmatpush2.msra.mxu0 0.0
    %334 = vmatprep.subr.mxu0 0.0
    %335 = vmatpush2.msra.mxu0 0.0
    %336 = vmatprep.subr.mxu0 0.0
    %337 = vmatpush2.msra.mxu0 0.0
    %338 = vmatprep.subr.mxu0 0.0
    %339 = vmatpush2.msra.mxu0 0.0
    %340 = vmatprep.subr.mxu0 0.0
    %341 = vmatpush2.msra.mxu0 0.0
    %342 = vmatprep.subr.mxu0 0.0
    %343 = vmatpush2.msra.mxu0 0.0
    %344 = vmatprep.subr.mxu0 0.0
    %345 = vmatpush2.msra.mxu0 0.0
    %346 = vmatprep.mubr.f32.mxu0 0.0
    %347 = vmatmul.mubr.f32.gmra.mxu0 %v280
    %v348 = vpop.f32.mrf.mxu0
    %v349 = vadd.f32 0.0, %v348
    %v350 = vpop.f32.mrf.mxu0
    %351 = vdwg.mxu0
    %v352 = vmul.f32 %v349, %v198
    %v353 = vadd.f32 %v198, %v352
    %v354 = vmul.f32 %v353, %v353
    %355 = vmatprep.subr.mxu0 0.0
    %356 = vmatpush1.msra.mxu0 %v34
    %357 = vmatprep.subr.mxu0 0.0
    %358 = vmatpush1.msra.mxu0 %v33
    %359 = vmatprep.subr.mxu0 0.0
    %360 = vmatpush1.msra.mxu0 %v32
    %361 = vmatprep.subr.mxu0 0.0
    %362 = vmatpush1.msra.mxu0 %v31
    %363 = vmatprep.subr.mxu0 0.0
    %364 = vmatpush1.msra.mxu0 %v30
    %365 = vmatprep.subr.mxu0 0.0
    %366 = vmatpush1.msra.mxu0 %v29
    %367 = vmatprep.subr.mxu0 0.0
    %368 = vmatpush1.msra.mxu0 %v28
    %369 = vmatprep.subr.mxu0 0.0
    %370 = vmatpush1.msra.mxu0 %v27
    %371 = vmatprep.subr.mxu0 0.0
    %372 = vmatpush1.msra.mxu0 %v26
    %373 = vmatprep.subr.mxu0 0.0
    %374 = vmatpush1.msra.mxu0 %v25
    %375 = vmatprep.subr.mxu0 0.0
    %376 = vmatpush1.msra.mxu0 %v24
    %377 = vmatprep.subr.mxu0 0.0
    %378 = vmatpush1.msra.mxu0 %v23
    %379 = vmatprep.subr.mxu0 0.0
    %380 = vmatpush1.msra.mxu0 %v22
    %381 = vmatprep.subr.mxu0 0.0
    %382 = vmatpush1.msra.mxu0 %v21
    %383 = vmatprep.subr.mxu0 0.0
    %384 = vmatpush1.msra.mxu0 %v20
    %385 = vmatprep.subr.mxu0 0.0
    %386 = vmatpush1.msra.mxu0 %v19
    %387 = vmatprep.subr.mxu0 0.0
    %388 = vmatpush2.msra.mxu0 0.0
    %389 = vmatprep.subr.mxu0 0.0
    %390 = vmatpush2.msra.mxu0 0.0
    %391 = vmatprep.subr.mxu0 0.0
    %392 = vmatpush2.msra.mxu0 0.0
    %393 = vmatprep.subr.mxu0 0.0
    %394 = vmatpush2.msra.mxu0 0.0
    %395 = vmatprep.subr.mxu0 0.0
    %396 = vmatpush2.msra.mxu0 0.0
    %397 = vmatprep.subr.mxu0 0.0
    %398 = vmatpush2.msra.mxu0 0.0
    %399 = vmatprep.subr.mxu0 0.0
    %400 = vmatpush2.msra.mxu0 0.0
    %401 = vmatprep.subr.mxu0 0.0
    %402 = vmatpush2.msra.mxu0 0.0
    %403 = vmatprep.subr.mxu0 0.0
    %404 = vmatpush2.msra.mxu0 0.0
    %405 = vmatprep.subr.mxu0 0.0
    %406 = vmatpush2.msra.mxu0 0.0
    %407 = vmatprep.subr.mxu0 0.0
    %408 = vmatpush2.msra.mxu0 0.0
    %409 = vmatprep.subr.mxu0 0.0
    %410 = vmatpush2.msra.mxu0 0.0
    %411 = vmatprep.subr.mxu0 0.0
    %412 = vmatpush2.msra.mxu0 0.0
    %413 = vmatprep.subr.mxu0 0.0
    %414 = vmatpush2.msra.mxu0 0.0
    %415 = vmatprep.subr.mxu0 0.0
    %416 = vmatpush2.msra.mxu0 0.0
    %417 = vmatprep.subr.mxu0 0.0
    %418 = vmatpush2.msra.mxu0 0.0
    %419 = vmatprep.mubr.f32.mxu0 0.0
    %420 = vmatmul.mubr.f32.gmra.mxu0 %v354
    %v421 = vpop.f32.mrf.mxu0
    %v422 = vadd.f32 0.0, %v421
    %v423 = vpop.f32.mrf.mxu0
    %424 = vdwg.mxu0
    %v425 = vadd.f32 %v422, %v112
    %v426 = vadd.f32 %v422, 1e-07
    %v427 = vmul.f32 %v425, -2.0
    %v428 = vrcp.pop %v426
    %430 = vrot.lane.b32.xlu0 %v428, 120
    %v431 = vpop.permute.xlu0 %430
    %v433 = vmul.f32 %v427, %v431
    %v435 = vsel %vm123, %v433, 0
    %437 = vmatprep.subr.mxu0 0.0
    %438 = vmatpush1.msra.mxu0 0.0
    %439 = vmatprep.subr.mxu0 0.0
    %440 = vmatpush1.msra.mxu0 0.0
    %441 = vmatprep.subr.mxu0 0.0
    %442 = vmatpush1.msra.mxu0 0.0
    %443 = vmatprep.subr.mxu0 0.0
    %444 = vmatpush1.msra.mxu0 0.0
    %445 = vmatprep.subr.mxu0 0.0
    %446 = vmatpush1.msra.mxu0 0.0
    %447 = vmatprep.subr.mxu0 0.0
    %448 = vmatpush1.msra.mxu0 0.0
    %449 = vmatprep.subr.mxu0 0.0
    %450 = vmatpush1.msra.mxu0 0.0
    %451 = vmatprep.subr.mxu0 0.0
    %452 = vmatpush1.msra.mxu0 0.0
    %453 = vmatprep.subr.mxu0 0.0
    %454 = vmatpush1.msra.mxu0 0.0
    %455 = vmatprep.subr.mxu0 0.0
    %456 = vmatpush1.msra.mxu0 0.0
    %457 = vmatprep.subr.mxu0 0.0
    %458 = vmatpush1.msra.mxu0 0.0
    %459 = vmatprep.subr.mxu0 0.0
    %460 = vmatpush1.msra.mxu0 0.0
    %461 = vmatprep.subr.mxu0 0.0
    %462 = vmatpush1.msra.mxu0 0.0
    %463 = vmatprep.subr.mxu0 0.0
    %464 = vmatpush1.msra.mxu0 0.0
    %465 = vmatprep.subr.mxu0 0.0
    %466 = vmatpush1.msra.mxu0 0.0
    %467 = vmatprep.subr.mxu0 0.0
    %468 = vmatpush1.msra.mxu0 %v35
    %469 = vmatprep.subr.mxu0 0.0
    %470 = vmatpush2.msra.mxu0 0.0
    %471 = vmatprep.subr.mxu0 0.0
    %472 = vmatpush2.msra.mxu0 0.0
    %473 = vmatprep.subr.mxu0 0.0
    %474 = vmatpush2.msra.mxu0 0.0
    %475 = vmatprep.subr.mxu0 0.0
    %476 = vmatpush2.msra.mxu0 0.0
    %477 = vmatprep.subr.mxu0 0.0
    %478 = vmatpush2.msra.mxu0 0.0
    %479 = vmatprep.subr.mxu0 0.0
    %480 = vmatpush2.msra.mxu0 0.0
    %481 = vmatprep.subr.mxu0 0.0
    %482 = vmatpush2.msra.mxu0 0.0
    %483 = vmatprep.subr.mxu0 0.0
    %484 = vmatpush2.msra.mxu0 0.0
    %485 = vmatprep.subr.mxu0 0.0
    %486 = vmatpush2.msra.mxu0 0.0
    %487 = vmatprep.subr.mxu0 0.0
    %488 = vmatpush2.msra.mxu0 0.0
    %489 = vmatprep.subr.mxu0 0.0
    %490 = vmatpush2.msra.mxu0 0.0
    %491 = vmatprep.subr.mxu0 0.0
    %492 = vmatpush2.msra.mxu0 0.0
    %493 = vmatprep.subr.mxu0 0.0
    %494 = vmatpush2.msra.mxu0 0.0
    %495 = vmatprep.subr.mxu0 0.0
    %496 = vmatpush2.msra.mxu0 0.0
    %497 = vmatprep.subr.mxu0 0.0
    %498 = vmatpush2.msra.mxu0 0.0
    %499 = vmatprep.subr.mxu0 0.0
    %500 = vmatpush2.msra.mxu0 0.0
    %501 = vmatprep.mubr.f32.mxu0 0.0
    %502 = vmatmul.mubr.f32.gmra.mxu0 %v435
    %v503 = vpop.f32.mrf.mxu0
    %v504 = vadd.f32 0.0, %v503
    %v505 = vpop.f32.mrf.mxu0
    %506 = vdwg.mxu0
    %v507 = vmul.f32 %v504, %v353
    %v508 = vadd.f32 %v353, %v507
    %509 = vst [vmem:[#allocation2] sm:$0xff] %v508
    // Predicated region
    $region18: #{tpu_custom_call.1} parent=1 // pred_check
      _
    $region19: #{tpu_custom_call.1} parent=1 // pred_check_branch
      %511 = sbr.rel (0) target = $region21
    $region20: #{tpu_custom_call.1} parent=1 // pred_region
      %s513 = ssub.s32 128, 128
      %514 = vsyncadd [#allocation3], %s513
      %s516 = sshll.u32 [#allocation2], 4
      %s517 = int_to_ptr.vmem [resolvable:$true] %s516
      %519 = dma.vmem_to_hbm [thread:$0]  %s517, 128, %s4, [#allocation3]
    $region21: #{tpu_custom_call.1} parent=1 // pred_fallthru
      _
    // Predicated region
    $region22: #{tpu_custom_call.1} parent=1 // pred_check
      _
    $region23: #{tpu_custom_call.1} parent=1 // pred_check_branch
      %521 = sbr.rel (0) target = $region25
    $region24: #{tpu_custom_call.1} parent=1 // pred_region
      %522 = dma.done [#allocation3], 128
    $region25: #{tpu_custom_call.1} parent=1 // pred_fallthru
      _
    %523 = vsyncpa [#allocation3], 1

</llo_original>
